<compile_context>
chip_gen: v7x
topology: tpu7x:2x2x1
jax: 0.10.0
libtpu: 0.0.40
codegen_flags: <defaults>
</compile_context>

<pallas_src>
import functools
import math

import jax
import jax.numpy as jnp
from jax.experimental import pallas as pl
from jax.experimental.pallas import tpu as pltpu

_LN_EPS = 1e-5  # torch.nn.LayerNorm default


def _round_up(x, m):
    return (x + m - 1) // m * m


@functools.lru_cache(maxsize=1)
def _vmem_limit_bytes():
    # Generation-aware VMEM budget: ~75% of physical, capped at 100 MiB.
    #   v7x (64 MiB/TC)   -> ~48 MiB (headroom for double buffers / compiler scratch)
    #   v5e/v6e (128 MiB) -> ~96 MiB (well above the 16/32 MiB scoped defaults)
    try:
        phys = int(pltpu.get_tpu_info().vmem_capacity_bytes)
    except Exception:
        phys = 64 * 1024 * 1024
    return min(phys * 3 // 4, 100 * 1024 * 1024)


def _compiler_params():
    return pltpu.CompilerParams(
        dimension_semantics=("parallel",),
        vmem_limit_bytes=_vmem_limit_bytes(),
    )


def _layernorm_f32(x, g, b):
    mu = jnp.mean(x, axis=-1, keepdims=True)
    var = jnp.mean(jnp.square(x - mu), axis=-1, keepdims=True)
    return (x - mu) * jax.lax.rsqrt(var + _LN_EPS) * g + b


def _gelu_exact(x):
    # exact erf-based GELU, matching torch.nn.GELU() default
    return 0.5 * x * (1.0 + jax.lax.erf(x * (1.0 / math.sqrt(2.0))))


# ---------------------------------------------------------------------------
# Kernel A: LayerNorm + Linear (ln_1 + c_qkv), row-tiled over M
# ---------------------------------------------------------------------------
def _ln_qkv_kernel(x_ref, g_ref, b_ref, w_ref, bias_ref, o_ref):
    x = x_ref[...].astype(jnp.float32)                                   # (tm, W)
    xn = _layernorm_f32(x, g_ref[...].astype(jnp.float32),
                        b_ref[...].astype(jnp.float32))
    y = jnp.dot(xn.astype(w_ref.dtype), w_ref[...],
                preferred_element_type=jnp.float32)                      # (tm, 3W)
    o_ref[...] = (y + bias_ref[...].astype(jnp.float32)).astype(o_ref.dtype)


def ln_qkv_pallas(x, g, b, w, bias, *, tm):
    M, W = x.shape
    N = w.shape[1]
    cost = pl.CostEstimate(
        flops=2 * M * W * N,
        transcendentals=M,
        bytes_accessed=(x.size + M * N) * x.dtype.itemsize
        + (w.size + bias.size + g.size + b.size) * w.dtype.itemsize,
    )
    return pl.pallas_call(
        _ln_qkv_kernel,
        out_shape=jax.ShapeDtypeStruct((M, N), x.dtype),
        grid_spec=pltpu.PrefetchScalarGridSpec(
            num_scalar_prefetch=0,
            grid=(pl.cdiv(M, tm),),
            in_specs=[
                pl.BlockSpec((tm, W), lambda i: (i, 0)),     # x tile
                pl.BlockSpec((1, W), lambda i: (0, 0)),      # ln_1 gamma
                pl.BlockSpec((1, W), lambda i: (0, 0)),      # ln_1 beta
                pl.BlockSpec((W, N), lambda i: (0, 0)),      # c_qkv weight (resident)
                pl.BlockSpec((1, N), lambda i: (0, 0)),      # c_qkv bias
            ],
            out_specs=pl.BlockSpec((tm, N), lambda i: (i, 0)),
        ),
        compiler_params=_compiler_params(),
        cost_estimate=cost,
    )(x, g.reshape(1, W), b.reshape(1, W), w, bias.reshape(1, N))


# ---------------------------------------------------------------------------
# Kernel B: per-batch multi-head self-attention on packed qkv (native layout)
# ---------------------------------------------------------------------------
def _attention_kernel(qkv_ref, o_ref, *, heads, attn_ch, scale):
    qkv = qkv_ref[0].astype(jnp.float32)                                 # (S, 3W)
    outs = []
    for h in range(heads):                                               # static unroll
        base = h * 3 * attn_ch
        q = qkv[:, base:base + attn_ch] * scale                          # one-sided scale
        k = qkv[:, base + attn_ch:base + 2 * attn_ch]
        v = qkv[:, base + 2 * attn_ch:base + 3 * attn_ch]
        # contract last dims directly (no explicit K transpose / relayout)
        s = jax.lax.dot_general(q, k, (((1,), (1,)), ((), ())),
                                preferred_element_type=jnp.float32)      # (S, S)
        s = s - jnp.max(s, axis=-1, keepdims=True)
        p = jnp.exp(s)
        p = p * pl.reciprocal(jnp.sum(p, axis=-1, keepdims=True), approx=True)
        outs.append(jnp.dot(p, v, preferred_element_type=jnp.float32))   # (S, attn_ch)
    # lane-dense (S, W) store: heads-major channel order, same as the torch module
    o_ref[0] = jnp.concatenate(outs, axis=-1).astype(o_ref.dtype)


def attention_pallas(qkv, *, heads, attn_ch, scale):
    B, S, C3 = qkv.shape
    W = heads * attn_ch
    kernel = functools.partial(_attention_kernel, heads=heads,
                               attn_ch=attn_ch, scale=scale)
    cost = pl.CostEstimate(
        flops=4 * B * S * S * W,
        transcendentals=B * heads * S * (S + 1),
        bytes_accessed=(qkv.size + B * S * W) * qkv.dtype.itemsize,
    )
    return pl.pallas_call(
        kernel,
        out_shape=jax.ShapeDtypeStruct((B, S, W), qkv.dtype),
        grid_spec=pltpu.PrefetchScalarGridSpec(
            num_scalar_prefetch=0,
            grid=(B,),
            in_specs=[pl.BlockSpec((1, S, C3), lambda b: (b, 0, 0))],
            out_specs=pl.BlockSpec((1, S, W), lambda b: (b, 0, 0)),
        ),
        compiler_params=_compiler_params(),
        cost_estimate=cost,
    )(qkv)


# ---------------------------------------------------------------------------
# Kernel C (fused old 3+4): attn c_proj + residual + ln_2 + c_fc + GELU + c_proj
#                           + residual, row-tiled over M
# ---------------------------------------------------------------------------
def _proj_res_ln_mlp_kernel(a_ref, x_ref, wo_ref, bo_ref, g_ref, b_ref,
                            w1_ref, b1_ref, w2_ref, b2_ref, o_ref):
    x = x_ref[...].astype(jnp.float32)                                   # (tm, W)
    a = jnp.dot(a_ref[...].astype(wo_ref.dtype), wo_ref[...],
                preferred_element_type=jnp.float32)
    x1 = x + a + bo_ref[...].astype(jnp.float32)                         # attn residual
    xn = _layernorm_f32(x1, g_ref[...].astype(jnp.float32),
                        b_ref[...].astype(jnp.float32))
    h = jnp.dot(xn.astype(w1_ref.dtype), w1_ref[...],
                preferred_element_type=jnp.float32)
    h = _gelu_exact(h + b1_ref[...].astype(jnp.float32))                 # (tm, H)
    y = jnp.dot(h.astype(w2_ref.dtype), w2_ref[...],
                preferred_element_type=jnp.float32)
    o_ref[...] = (x1 + y + b2_ref[...].astype(jnp.float32)).astype(o_ref.dtype)


def proj_res_ln_mlp_pallas(a, x, w_ao, b_ao, g, b, w1, b1, w2, b2, *, tm):
    M, W = x.shape
    H = w1.shape[1]
    cost = pl.CostEstimate(
        flops=2 * M * W * (W + 2 * H),
        transcendentals=M * (H + 1),
        bytes_accessed=(a.size + x.size + M * W) * x.dtype.itemsize
        + (w_ao.size + w1.size + w2.size) * w_ao.dtype.itemsize,
    )
    return pl.pallas_call(
        _proj_res_ln_mlp_kernel,
        out_shape=jax.ShapeDtypeStruct((M, W), x.dtype),
        grid_spec=pltpu.PrefetchScalarGridSpec(
            num_scalar_prefetch=0,
            grid=(pl.cdiv(M, tm),),
            in_specs=[
                pl.BlockSpec((tm, W), lambda i: (i, 0)),     # attention output tile
                pl.BlockSpec((tm, W), lambda i: (i, 0)),     # residual x tile
                pl.BlockSpec((W, W), lambda i: (0, 0)),      # attn c_proj weight
                pl.BlockSpec((1, W), lambda i: (0, 0)),      # attn c_proj bias
                pl.BlockSpec((1, W), lambda i: (0, 0)),      # ln_2 gamma
                pl.BlockSpec((1, W), lambda i: (0, 0)),      # ln_2 beta
                pl.BlockSpec((W, H), lambda i: (0, 0)),      # c_fc weight
                pl.BlockSpec((1, H), lambda i: (0, 0)),      # c_fc bias
                pl.BlockSpec((H, W), lambda i: (0, 0)),      # mlp c_proj weight
                pl.BlockSpec((1, W), lambda i: (0, 0)),      # mlp c_proj bias
            ],
            out_specs=pl.BlockSpec((tm, W), lambda i: (i, 0)),
        ),
        compiler_params=_compiler_params(),
        cost_estimate=cost,
    )(a, x, w_ao, b_ao.reshape(1, W), g.reshape(1, W), b.reshape(1, W),
      w1, b1.reshape(1, H), w2, b2.reshape(1, W))


# ---------------------------------------------------------------------------
# Full block wrapper
# ---------------------------------------------------------------------------
def residual_attention_block(x, params, *, heads, tm=256):
    """x: (B, S, W).  Weights stored (in, out) == PyTorch weight.T.
    Pass bf16 weights to run the MXU in bf16 (f32 accumulation is kept)."""
    B, S, W = x.shape
    assert W % heads == 0, "width must be divisible by heads"
    M = B * S
    attn_ch = W // heads
    scale = 1.0 / math.sqrt(attn_ch)      # folded two-sided d**-1/4 scaling

    tm_eff = min(tm, _round_up(M, 8))     # big row tiles; ragged tail handled by cdiv grid
    x2d = x.reshape(M, W)                 # contiguous reshape — no copy

    # ---- attention branch: ln_1 -> c_qkv -> MHSA ----
    qkv = ln_qkv_pallas(x2d, params["ln1_g"], params["ln1_b"],
                        params["w_qkv"], params["b_qkv"], tm=tm_eff)       # (M, 3W)
    attn = attention_pallas(qkv.reshape(B, S, 3 * W), heads=heads,
                            attn_ch=attn_ch, scale=scale)                  # (B, S, W)

    # ---- fused: attn c_proj + residual + ln_2 + MLP + residual ----
    out = proj_res_ln_mlp_pallas(attn.reshape(M, W), x2d,
                                 params["w_ao"], params["b_ao"],
                                 params["ln2_g"], params["ln2_b"],
                                 params["w_fc"], params["b_fc"],
                                 params["w_proj"], params["b_proj"], tm=tm_eff)
    return out.reshape(B, S, W)


# ---------------------------------------------------------------------------
# Pure-JAX reference (mirrors the PyTorch module forward)
# ---------------------------------------------------------------------------
def block_ref(x, params, *, heads):
    def ln(v, g, b):
        mu = jnp.mean(v, axis=-1, keepdims=True)
        var = jnp.mean(jnp.square(v - mu), axis=-1, keepdims=True)
        return (v - mu) * jax.lax.rsqrt(var + _LN_EPS) * g + b

    B, S, W = x.shape
    h = ln(x, params["ln1_g"], params["ln1_b"])
    qkv = h @ params["w_qkv"] + params["b_qkv"]
    attn_ch = W // heads
    scale = 1.0 / math.sqrt(math.sqrt(attn_ch))
    qkv4 = qkv.reshape(B, S, heads, 3 * attn_ch)
    q = qkv4[..., :attn_ch] * scale
    k = qkv4[..., attn_ch:2 * attn_ch] * scale
    v = qkv4[..., 2 * attn_ch:]
    w = jnp.einsum("bthc,bshc->bhts", q, k)
    w = jax.nn.softmax(w.astype(jnp.float32), axis=-1).astype(qkv.dtype)
    a = jnp.einsum("bhts,bshc->bthc", w, v).reshape(B, S, W)
    a = a @ params["w_ao"] + params["b_ao"]
    x = x + a
    h = ln(x, params["ln2_g"], params["ln2_b"])
    h1 = h @ params["w_fc"] + params["b_fc"]
    h1 = 0.5 * h1 * (1.0 + jax.lax.erf(h1 * (1.0 / math.sqrt(2.0))))
    h2 = h1 @ params["w_proj"] + params["b_proj"]
    return x + h2


if __name__ == "__main__":
    # Small shapes consistent with the module: batch=2, n_ctx=8, width=32, heads=2.
    batch, n_ctx, width, heads = 2, 8, 32, 2
    hidden = 4 * width
    init_scale = 0.05

    key = jax.random.PRNGKey(0)
    ks = jax.random.split(key, 9)

    x = jax.random.normal(ks[0], (batch, n_ctx, width), dtype=jnp.float32)

    # init_linear: weight ~ N(0, init_scale), bias = 0.  PyTorch stores (out, in);
    # we store the transposed (in, out) layout directly.  LayerNorm params are
    # perturbed to exercise the affine path.
    params = {
        "ln1_g": 1.0 + 0.1 * jax.random.normal(ks[1], (width,), jnp.float32),
        "ln1_b": 0.1 * jax.random.normal(ks[2], (width,), jnp.float32),
        "w_qkv": init_scale * jax.random.normal(ks[3], (width, 3 * width), jnp.float32),
        "b_qkv": jnp.zeros((3 * width,), jnp.float32),
        "w_ao": init_scale * jax.random.normal(ks[4], (width, width), jnp.float32),
        "b_ao": jnp.zeros((width,), jnp.float32),
        "ln2_g": 1.0 + 0.1 * jax.random.normal(ks[5], (width,), jnp.float32),
        "ln2_b": 0.1 * jax.random.normal(ks[6], (width,), jnp.float32),
        "w_fc": init_scale * jax.random.normal(ks[7], (width, hidden), jnp.float32),
        "b_fc": jnp.zeros((hidden,), jnp.float32),
        "w_proj": init_scale * jax.random.normal(ks[8], (hidden, width), jnp.float32),
        "b_proj": jnp.zeros((width,), jnp.float32),
    }

    ref = block_ref(x, params, heads=heads)

    # f32 weights: tight correctness check (approx softmax reciprocal -> ~1e-4 slack).
    out = jax.block_until_ready(residual_attention_block(x, params, heads=heads))
    assert out.shape == (batch, n_ctx, width)
    assert jnp.allclose(out, ref, atol=2e-3, rtol=2e-3), "f32 mismatch vs reference"

    # bf16 weights: exercises the bf16-MXU fast path (f32 accumulation retained).
    params_bf16 = {k: v.astype(jnp.bfloat16) for k, v in params.items()}
    out_bf = jax.block_until_ready(
        residual_attention_block(x, params_bf16, heads=heads))
    assert out_bf.shape == (batch, n_ctx, width)
    assert jnp.allclose(out_bf, ref, atol=5e-2, rtol=5e-2), "bf16 mismatch vs reference"

    print("KERNEL_OK")
</pallas_src>

<mosaic_0001>
module attributes {stable_mosaic.version = 11 : i64} {
  func.func @_ln_qkv_kernel(%arg0: i32, %arg1: memref<16x32xf32, #tpu.memory_space<vmem>>, %arg2: memref<1x32xf32, #tpu.memory_space<vmem>>, %arg3: memref<1x32xf32, #tpu.memory_space<vmem>>, %arg4: memref<32x96xf32, #tpu.memory_space<vmem>>, %arg5: memref<1x96xf32, #tpu.memory_space<vmem>>, %arg6: memref<16x96xf32, #tpu.memory_space<vmem>>) attributes {dimension_semantics = [#tpu.dimension_semantics<parallel>], iteration_bounds = array<i64: 1>, scalar_prefetch = 0 : i64, scratch_operands = 0 : i64, tpu.core_type = #tpu.core_type<tc>, window_params = [{transform_indices = @transform_0, window_bounds = array<i64: 16, 32>}, {pipeline_mode = #tpu.pipeline_mode<synchronous>, transform_indices = @transform_1, window_bounds = array<i64: 1, 32>}, {pipeline_mode = #tpu.pipeline_mode<synchronous>, transform_indices = @transform_2, window_bounds = array<i64: 1, 32>}, {pipeline_mode = #tpu.pipeline_mode<synchronous>, transform_indices = @transform_3, window_bounds = array<i64: 32, 96>}, {pipeline_mode = #tpu.pipeline_mode<synchronous>, transform_indices = @transform_4, window_bounds = array<i64: 1, 96>}, {transform_indices = @transform_5, window_bounds = array<i64: 16, 96>}]} {
    %c0 = arith.constant 0 : index
    %c0_0 = arith.constant 0 : index
    %0 = vector.load %arg1[%c0, %c0_0] : memref<16x32xf32, #tpu.memory_space<vmem>>, vector<16x32xf32>
    %c0_1 = arith.constant 0 : index
    %c0_2 = arith.constant 0 : index
    %1 = vector.load %arg2[%c0_1, %c0_2] : memref<1x32xf32, #tpu.memory_space<vmem>>, vector<1x32xf32>
    %c0_3 = arith.constant 0 : index
    %c0_4 = arith.constant 0 : index
    %2 = vector.load %arg3[%c0_3, %c0_4] : memref<1x32xf32, #tpu.memory_space<vmem>>, vector<1x32xf32>
    %cst = arith.constant dense<0.000000e+00> : vector<16xf32>
    %3 = vector.multi_reduction <add>, %0, %cst [1] : vector<16x32xf32> to vector<16xf32>
    %4 = vector.shape_cast %3 : vector<16xf32> to vector<16x1xf32>
    %cst_5 = arith.constant 3.200000e+01 : f32
    %5 = vector.broadcast %cst_5 : f32 to vector<16x1xf32>
    %6 = arith.divf %4, %5 : vector<16x1xf32>
    %7 = vector.broadcast %6 : vector<16x1xf32> to vector<16x32xf32>
    %8 = arith.subf %0, %7 : vector<16x32xf32>
    %9 = arith.mulf %8, %8 : vector<16x32xf32>
    %cst_6 = arith.constant dense<0.000000e+00> : vector<16xf32>
    %10 = vector.multi_reduction <add>, %9, %cst_6 [1] : vector<16x32xf32> to vector<16xf32>
    %11 = vector.shape_cast %10 : vector<16xf32> to vector<16x1xf32>
    %cst_7 = arith.constant 3.200000e+01 : f32
    %12 = vector.broadcast %cst_7 : f32 to vector<16x1xf32>
    %13 = arith.divf %11, %12 : vector<16x1xf32>
    %14 = vector.broadcast %6 : vector<16x1xf32> to vector<16x32xf32>
    %15 = arith.subf %0, %14 : vector<16x32xf32>
    %cst_8 = arith.constant 9.99999974E-6 : f32
    %16 = vector.broadcast %cst_8 : f32 to vector<16x1xf32>
    %17 = arith.addf %13, %16 : vector<16x1xf32>
    %18 = math.rsqrt %17 : vector<16x1xf32>
    %19 = vector.broadcast %18 : vector<16x1xf32> to vector<16x32xf32>
    %20 = arith.mulf %15, %19 : vector<16x32xf32>
    %21 = vector.broadcast %1 : vector<1x32xf32> to vector<16x32xf32>
    %22 = arith.mulf %20, %21 : vector<16x32xf32>
    %23 = vector.broadcast %2 : vector<1x32xf32> to vector<16x32xf32>
    %24 = arith.addf %22, %23 : vector<16x32xf32>
    %c0_9 = arith.constant 0 : index
    %c0_10 = arith.constant 0 : index
    %25 = vector.load %arg4[%c0_9, %c0_10] : memref<32x96xf32, #tpu.memory_space<vmem>>, vector<32x96xf32>
    %cst_11 = arith.constant dense<0.000000e+00> : vector<16x96xf32>
    %26 = tpu.matmul %24, %25, %cst_11 {dimension_numbers = #tpu.dot_dimension_numbers<[1], [0], [0], [1], [0, 0, 1, 1], [], []>} : vector<16x32xf32>, vector<32x96xf32>, vector<16x96xf32> -> vector<16x96xf32>
    %c0_12 = arith.constant 0 : index
    %c0_13 = arith.constant 0 : index
    %27 = vector.load %arg5[%c0_12, %c0_13] : memref<1x96xf32, #tpu.memory_space<vmem>>, vector<1x96xf32>
    %28 = vector.broadcast %27 : vector<1x96xf32> to vector<16x96xf32>
    %29 = arith.addf %26, %28 : vector<16x96xf32>
    %c0_14 = arith.constant 0 : index
    %c0_15 = arith.constant 0 : index
    %30 = vector.load %arg6[%c0_14, %c0_15] : memref<16x96xf32, #tpu.memory_space<vmem>>, vector<16x96xf32>
    tpu.vector_store %arg6[%c0_14, %c0_15], %29 {strides = array<i32>} : memref<16x96xf32, #tpu.memory_space<vmem>>, vector<16x96xf32>,
    return
  }
  func.func @transform_0(%arg0: i32) -> (i32, i32) {
    %c0_i32 = arith.constant 0 : i32
    %c0_i32_0 = arith.constant 0 : i32
    return %arg0, %c0_i32 : i32, i32
  }
  func.func @transform_1(%arg0: i32) -> (i32, i32) {
    %c0_i32 = arith.constant 0 : i32
    %c0_i32_0 = arith.constant 0 : i32
    %c0_i32_1 = arith.constant 0 : i32
    return %c0_i32, %c0_i32_0 : i32, i32
  }
  func.func @transform_2(%arg0: i32) -> (i32, i32) {
    %c0_i32 = arith.constant 0 : i32
    %c0_i32_0 = arith.constant 0 : i32
    %c0_i32_1 = arith.constant 0 : i32
    return %c0_i32, %c0_i32_0 : i32, i32
  }
  func.func @transform_3(%arg0: i32) -> (i32, i32) {
    %c0_i32 = arith.constant 0 : i32
    %c0_i32_0 = arith.constant 0 : i32
    %c0_i32_1 = arith.constant 0 : i32
    return %c0_i32, %c0_i32_0 : i32, i32
  }
  func.func @transform_4(%arg0: i32) -> (i32, i32) {
    %c0_i32 = arith.constant 0 : i32
    %c0_i32_0 = arith.constant 0 : i32
    %c0_i32_1 = arith.constant 0 : i32
    return %c0_i32, %c0_i32_0 : i32, i32
  }
  func.func @transform_5(%arg0: i32) -> (i32, i32) {
    %c0_i32 = arith.constant 0 : i32
    %c0_i32_0 = arith.constant 0 : i32
    return %arg0, %c0_i32 : i32, i32
  }
}

</mosaic_0001>

<llo_original>
// kernel: tpu_custom_call.1
$region0: #{tpu_custom_call.1}
  #allocation0 [shape = 'u32[]', space=smem, size = 0x4, offset = 0x4, fixed_abs, tag = 'smem constant byte address 0x4 - core index']
  #allocation1 [shape = 'u32[144,128]{1,0:T(1,128)}', space=vmem, size = 0x12000, scoped, tag = 'internal scratch']
  %s0 = inlined_call_operand.hbm [shape: f32[16,32], index: 0, kind: input, shape index: {}]
  %s1 = inlined_call_operand.vmem [shape: f32[1,32], index: 1, kind: input, shape index: {}]
  %s2 = inlined_call_operand.vmem [shape: f32[1,32], index: 2, kind: input, shape index: {}]
  %s3 = inlined_call_operand.hbm [shape: f32[32,96], index: 3, kind: input, shape index: {}]
  %s4 = inlined_call_operand.vmem [shape: f32[1,96], index: 4, kind: input, shape index: {}]
  %s5 = inlined_call_operand.hbm [shape: f32[16,96], index: 5, kind: output, shape index: {}]
  %s6 = sld [smem:[#allocation0]]
  $region38: #{tpu_custom_call.1} parent=0
    _
  %s8 = ssub.s32 1, %s6
  %s9 = scalar_select 0, %s8, %s6
  $region1: #{tpu_custom_call.1} parent=0
    #allocation2 [shape = 'u8[8192]{0}', space=vmem, size = 0x2000, scoped, tag = 'input window, operand 0, single buffered']
    #allocation3 [shape = 's32[1]{0}', space=sflag, size = 0x4, scoped, tag = 'scoped memory for tpu_custom_call.1']
    #allocation4 [shape = 's32[1]{0}', space=sflag, size = 0x4, scoped, tag = 'scoped memory for tpu_custom_call.1']
    #allocation5 [shape = 'u8[16384]{0}', space=vmem, size = 0x4000, scoped, tag = 'input window, operand 3, single buffered']
    #allocation6 [shape = 's32[1]{0}', space=sflag, size = 0x4, scoped, tag = 'scoped memory for tpu_custom_call.1']
    #allocation7 [shape = 'u8[8192]{0}', space=vmem, size = 0x2000, scoped, tag = 'output window, operand 0, single buffered']
    %10 = vsyncpa [#allocation3], 0
    %11 = vsyncpa [#allocation6], 0
    %12 = vsyncpa [#allocation4], 0
    // Predicated region
    $region2: #{tpu_custom_call.1} parent=1 // pred_check
      _
    $region3: #{tpu_custom_call.1} parent=1 // pred_check_branch
      %14 = sbr.rel (0) target = $region5
    $region4: #{tpu_custom_call.1} parent=1 // pred_region
      %s16 = ssub.s32 256, 256
      %17 = vsyncadd [#allocation3], %s16
      %s18 = sshll.u32 [#allocation2], 4
      %s19 = int_to_ptr.vmem [resolvable:$true] %s18
      %24 = dma.hbm_to_vmem [thread:$0]  %s0, 256, %s19, [#allocation3], 128, 128, 8
    $region5: #{tpu_custom_call.1} parent=1 // pred_fallthru
      _
    // Predicated region
    $region6: #{tpu_custom_call.1} parent=1 // pred_check
      _
    $region7: #{tpu_custom_call.1} parent=1 // pred_check_branch
      %26 = sbr.rel (0) target = $region9
    $region8: #{tpu_custom_call.1} parent=1 // pred_region
      _
    $region9: #{tpu_custom_call.1} parent=1 // pred_fallthru
      _
    // Predicated region
    $region10: #{tpu_custom_call.1} parent=1 // pred_check
      _
    $region11: #{tpu_custom_call.1} parent=1 // pred_check_branch
      %28 = sbr.rel (0) target = $region13
    $region12: #{tpu_custom_call.1} parent=1 // pred_region
      _
    $region13: #{tpu_custom_call.1} parent=1 // pred_fallthru
      _
    // Predicated region
    $region14: #{tpu_custom_call.1} parent=1 // pred_check
      _
    $region15: #{tpu_custom_call.1} parent=1 // pred_check_branch
      %30 = sbr.rel (0) target = $region17
    $region16: #{tpu_custom_call.1} parent=1 // pred_region
      %s32 = ssub.s32 512, 512
      %33 = vsyncadd [#allocation6], %s32
      %s34 = sshll.u32 [#allocation5], 4
      %s35 = int_to_ptr.vmem [resolvable:$true] %s34
      %40 = dma.hbm_to_vmem [thread:$0]  %s3, 512, %s35, [#allocation6], 128, 128, 8
    $region17: #{tpu_custom_call.1} parent=1 // pred_fallthru
      _
    // Predicated region
    $region18: #{tpu_custom_call.1} parent=1 // pred_check
      _
    $region19: #{tpu_custom_call.1} parent=1 // pred_check_branch
      %42 = sbr.rel (0) target = $region21
    $region20: #{tpu_custom_call.1} parent=1 // pred_region
      _
    $region21: #{tpu_custom_call.1} parent=1 // pred_fallthru
      _
    // Predicated region
    $region22: #{tpu_custom_call.1} parent=1 // pred_check
      _
    $region23: #{tpu_custom_call.1} parent=1 // pred_check_branch
      %44 = sbr.rel (0) target = $region25
    $region24: #{tpu_custom_call.1} parent=1 // pred_region
      %45 = dma.done [#allocation3], 256
    $region25: #{tpu_custom_call.1} parent=1 // pred_fallthru
      _
    // Predicated region
    $region26: #{tpu_custom_call.1} parent=1 // pred_check
      _
    $region27: #{tpu_custom_call.1} parent=1 // pred_check_branch
      %47 = sbr.rel (0) target = $region29
    $region28: #{tpu_custom_call.1} parent=1 // pred_region
      %48 = dma.done [#allocation6], 512
    $region29: #{tpu_custom_call.1} parent=1 // pred_fallthru
      _
    %v49 = vld [vmem:[#allocation2] sm:$0xff]
    %v50 = vld [vmem:[#allocation2 + $0x8] sm:$0xff]
    %v51 = vld [vmem:[%s1] sm:$0x1]
    %v52 = vld [vmem:[%s2] sm:$0x1]
    %vm53 = vcmask 261120
    %v54 = vsel %vm53, %v49, 0.0
    %55 = vadd.xlane.f32.xlu0 %v54
    %v56 = vpop.xlane.xlu0 %55
    %v57 = vsel %vm53, %v50, 0.0
    %58 = vadd.xlane.f32.xlu0 %v57
    %v59 = vpop.xlane.xlu0 %58
    %v60 = vrcp.pop 32.0
    %v61 = vmul.f32 %v56, %v60
    %v62 = vmul.f32 %v59, %v60
    %v63 = vsub.f32 %v49, %v61
    %v64 = vsub.f32 %v50, %v62
    %v65 = vmul.f32 %v63, %v63
    %v66 = vmul.f32 %v64, %v64
    %v67 = vsel %vm53, %v65, 0.0
    %68 = vadd.xlane.f32.xlu0 %v67
    %v69 = vpop.xlane.xlu0 %68
    %v70 = vsel %vm53, %v66, 0.0
    %71 = vadd.xlane.f32.xlu0 %v70
    %v72 = vpop.xlane.xlu0 %71
    %v73 = vmul.f32 %v69, %v60
    %v74 = vmul.f32 %v72, %v60
    %v75 = vadd.f32 %v73, 1e-05
    %v76 = vadd.f32 %v74, 1e-05
    %v77 = vrsqrt.pop %v75
    %v78 = vrsqrt.pop %v76
    %v79 = vmul.f32 %v63, %v77
    %v80 = vmul.f32 %v64, %v78
    %v82 = vlaneseq
    %v83 = vshrl.u32 %v82, 7
    %v84 = vsub.s32 0, %v83
    %v85 = vrot.slane %v51, %v84
    %v87 = vmul.f32 %v79, %v85
    %v88 = vmul.f32 %v80, %v85
    %v90 = vlaneseq
    %v91 = vshrl.u32 %v90, 7
    %v92 = vsub.s32 0, %v91
    %v93 = vrot.slane %v52, %v92
    %v95 = vadd.f32 %v87, %v93
    %v96 = vadd.f32 %v88, %v93
    %v97 = vld [vmem:[#allocation5] sm:$0xff]
    %v98 = vld [vmem:[#allocation5 + $0x8] sm:$0xff]
    %v99 = vld [vmem:[#allocation5 + $0x10] sm:$0xff]
    %v100 = vld [vmem:[#allocation5 + $0x18] sm:$0xff]
    %v101 = vld [vmem:[%s4] sm:$0x1]
    %v103 = vlaneseq
    %v104 = vshrl.u32 %v103, 7
    %v105 = vsub.s32 0, %v104
    %v106 = vrot.slane %v101, %v105
    %v109 = vsel %vm53, %v95, 0
    %v112 = vsel %vm53, %v96, 0
    %114 = vmatprep.subr.mxu0 0.0
    %115 = vmatpush1.msra.mxu0 %v97
    %116 = vmatprep.subr.mxu0 0.0
    %117 = vmatpush1.msra.mxu0 %v98
    %118 = vmatprep.subr.mxu0 0.0
    %119 = vmatpush1.msra.mxu0 %v99
    %120 = vmatprep.subr.mxu0 0.0
    %121 = vmatpush1.msra.mxu0 %v100
    %122 = vmatprep.subr.mxu0 0.0
    %123 = vmatpush1.msra.mxu0 0.0
    %124 = vmatprep.subr.mxu0 0.0
    %125 = vmatpush1.msra.mxu0 0.0
    %126 = vmatprep.subr.mxu0 0.0
    %127 = vmatpush1.msra.mxu0 0.0
    %128 = vmatprep.subr.mxu0 0.0
    %129 = vmatpush1.msra.mxu0 0.0
    %130 = vmatprep.subr.mxu0 0.0
    %131 = vmatpush1.msra.mxu0 0.0
    %132 = vmatprep.subr.mxu0 0.0
    %133 = vmatpush1.msra.mxu0 0.0
    %134 = vmatprep.subr.mxu0 0.0
    %135 = vmatpush1.msra.mxu0 0.0
    %136 = vmatprep.subr.mxu0 0.0
    %137 = vmatpush1.msra.mxu0 0.0
    %138 = vmatprep.subr.mxu0 0.0
    %139 = vmatpush1.msra.mxu0 0.0
    %140 = vmatprep.subr.mxu0 0.0
    %141 = vmatpush1.msra.mxu0 0.0
    %142 = vmatprep.subr.mxu0 0.0
    %143 = vmatpush1.msra.mxu0 0.0
    %144 = vmatprep.subr.mxu0 0.0
    %145 = vmatpush1.msra.mxu0 0.0
    %146 = vmatprep.subr.mxu0 0.0
    %147 = vmatpush1.msra.mxu0 0.0
    %148 = vmatprep.subr.mxu0 0.0
    %149 = vmatpush1.msra.mxu0 0.0
    %150 = vmatprep.subr.mxu0 0.0
    %151 = vmatpush1.msra.mxu0 0.0
    %152 = vmatprep.subr.mxu0 0.0
    %153 = vmatpush1.msra.mxu0 0.0
    %154 = vmatprep.subr.mxu0 0.0
    %155 = vmatpush1.msra.mxu0 0.0
    %156 = vmatprep.subr.mxu0 0.0
    %157 = vmatpush1.msra.mxu0 0.0
    %158 = vmatprep.subr.mxu0 0.0
    %159 = vmatpush1.msra.mxu0 0.0
    %160 = vmatprep.subr.mxu0 0.0
    %161 = vmatpush1.msra.mxu0 0.0
    %162 = vmatprep.subr.mxu0 0.0
    %163 = vmatpush1.msra.mxu0 0.0
    %164 = vmatprep.subr.mxu0 0.0
    %165 = vmatpush1.msra.mxu0 0.0
    %166 = vmatprep.subr.mxu0 0.0
    %167 = vmatpush1.msra.mxu0 0.0
    %168 = vmatprep.subr.mxu0 0.0
    %169 = vmatpush1.msra.mxu0 0.0
    %170 = vmatprep.subr.mxu0 0.0
    %171 = vmatpush1.msra.mxu0 0.0
    %172 = vmatprep.subr.mxu0 0.0
    %173 = vmatpush1.msra.mxu0 0.0
    %174 = vmatprep.subr.mxu0 0.0
    %175 = vmatpush1.msra.mxu0 0.0
    %176 = vmatprep.subr.mxu0 0.0
    %177 = vmatpush1.msra.mxu0 0.0
    %178 = vmatprep.mubr.f32.mxu0 0.0
    %179 = vmatmul.mubr.f32.gmra.mrb[0].mxu0 %v109
    %v180 = vpop.f32.mrb[0].mxu0
    %v181 = vadd.f32 %v106, %v180
    %v182 = vpop.f32.mrb[0].mxu0
    %183 = vmatprep.mubr.f32.mxu0 0.0
    %184 = vmatmul.mubr.f32.gmra.mrb[0].mxu0 %v112
    %v185 = vpop.f32.mrb[0].mxu0
    %v186 = vadd.f32 %v106, %v185
    %v187 = vpop.f32.mrb[0].mxu0
    %188 = vdwg.mxu0
    %vm189 = vcmask 785408
    %190 = vst.msk [vmem:[#allocation7] sm:$0xff] %vm189, %v181
    %191 = vst.msk [vmem:[#allocation7 + $0x8] sm:$0xff] %vm189, %v186
    // Predicated region
    $region30: #{tpu_custom_call.1} parent=1 // pred_check
      _
    $region31: #{tpu_custom_call.1} parent=1 // pred_check_branch
      %193 = sbr.rel (0) target = $region33
    $region32: #{tpu_custom_call.1} parent=1 // pred_region
      %s195 = ssub.s32 256, 256
      %196 = vsyncadd [#allocation4], %s195
      %s197 = sshll.u32 [#allocation7], 4
      %s198 = int_to_ptr.vmem [resolvable:$true] %s197
      %203 = dma.vmem_to_hbm [thread:$0]  %s198, 256, %s5, [#allocation4], 128, 128, 8
    $region33: #{tpu_custom_call.1} parent=1 // pred_fallthru
      _
    // Predicated region
    $region34: #{tpu_custom_call.1} parent=1 // pred_check
      _
    $region35: #{tpu_custom_call.1} parent=1 // pred_check_branch
      %205 = sbr.rel (0) target = $region37
    $region36: #{tpu_custom_call.1} parent=1 // pred_region
      %206 = dma.done [#allocation4], 256
    $region37: #{tpu_custom_call.1} parent=1 // pred_fallthru
      _
    %207 = vsyncpa [#allocation3], 1
    %208 = vsyncpa [#allocation6], 1
    %209 = vsyncpa [#allocation4], 1

</llo_original>
